<compile_context>
chip_gen: v5e
topology: v5e:2x2
jax: 0.10.0
libtpu: 0.0.40
codegen_flags: <defaults>
</compile_context>

<pallas_src>
import math

import jax
import jax.numpy as jnp
from jax import lax
from jax.experimental import pallas as pl
from jax.experimental.pallas import tpu as pltpu

_LANE = 128
_SUBLANE = 8


def _round_up(x, m):
    return (x + m - 1) // m * m


def _choose_row_tile(n_rows, tm_max):
    """Row tile (multiple of 8) and padded row count.

    Ensures >= 2 grid steps when there is enough work so v7x's two TensorCores
    both get a share of a "parallel" row axis (harmless on v5e/v6e).
    """
    r8 = _round_up(max(n_rows, 1), _SUBLANE)
    tm = min(_round_up(tm_max, _SUBLANE), r8)
    if r8 // tm < 2 and r8 >= 2 * _SUBLANE:
        tm = _round_up((r8 + 1) // 2, _SUBLANE)
    rows_padded = _round_up(r8, tm)
    return tm, rows_padded


# ---------------------------------------------------------------------------
# DDPM noise schedules (jnp port of ddpm_schedules)
# ---------------------------------------------------------------------------
def ddpm_schedules(beta1, beta2, T):
    assert beta1 < beta2 < 1.0, "beta1 and beta2 must be in (0, 1)"
    beta_t = (beta2 - beta1) * jnp.arange(0, T + 1, dtype=jnp.float32) / T + beta1
    sqrt_beta_t = jnp.sqrt(beta_t)
    alpha_t = 1.0 - beta_t
    log_alpha_t = jnp.log(alpha_t)
    alphabar_t = jnp.exp(jnp.cumsum(log_alpha_t))
    sqrtab = jnp.sqrt(alphabar_t)
    oneover_sqrta = 1.0 / jnp.sqrt(alpha_t)
    sqrtmab = jnp.sqrt(1.0 - alphabar_t)
    mab_over_sqrtmab_inv = (1.0 - alpha_t) / sqrtmab
    return {
        "alpha_t": alpha_t,
        "oneover_sqrta": oneover_sqrta,
        "sqrt_beta_t": sqrt_beta_t,
        "alphabar_t": alphabar_t,
        "sqrtab": sqrtab,
        "sqrtmab": sqrtmab,
        "mab_over_sqrtmab": mab_over_sqrtmab_inv,
    }


# ---------------------------------------------------------------------------
# Kernel 1: packed EmbedFC  (Linear -> GELU -> Linear), all groups in ONE call
# ---------------------------------------------------------------------------
def _make_embedfc_kernel(approx_gelu):
    def kernel(x_ref, w1_ref, b1_ref, w2_ref, b2_ref, o_ref):
        # x_ref : (tm, Dp)   w1_ref: (Dp, Ep)   b1_ref: (1, Ep)
        # w2_ref: (Ep, Ep)   b2_ref: (1, Ep)    o_ref : (tm, Ep)
        h = jnp.dot(x_ref[...], w1_ref[...], preferred_element_type=jnp.float32)
        h = h + b1_ref[...]
        if approx_gelu:
            # tanh GELU -> EUP slot (frees VALU bandwidth); looser numerics.
            g = jax.nn.gelu(h, approximate=True)
        else:
            # Exact GELU (matches torch nn.GELU default). Zero lanes stay 0.
            g = 0.5 * h * (1.0 + lax.erf(h * (1.0 / math.sqrt(2.0))))
        g = g.astype(w2_ref.dtype)
        o = jnp.dot(g, w2_ref[...], preferred_element_type=jnp.float32)
        o = o + b2_ref[...]
        o_ref[...] = o.astype(o_ref.dtype)
    return kernel


def packed_embed_fc(xs, params, *, tm_max=2048, use_bf16=False, approx_gelu=False):
    """Run G EmbedFC MLPs (Linear -> GELU -> Linear) in ONE pallas_call.

    The G problems are packed along the lane axis: input columns are
    concatenated, W1/W2 become block-diagonal, biases are concatenated.  With
    sum(emb_dims) <= 128 this removes all cross-group lane-padding waste and
    the G grid axis entirely.

    xs[g]     : array of shape (..., input_dim_g), flattened to
                (N_g, input_dim_g) exactly like torch's x.view(-1, input_dim).
    params[g] : (w1, b1, w2, b2) with w1: (input_dim_g, emb_dim_g),
                b1: (emb_dim_g,), w2: (emb_dim_g, emb_dim_g), b2: (emb_dim_g,).

    Returns a list of G arrays of shape (N_g, emb_dim_g), float32.
    """
    G = len(xs)
    assert len(params) == G and G >= 1

    x2ds = [x.reshape(-1, p[0].shape[0]).astype(jnp.float32)
            for x, p in zip(xs, params)]
    ns = [x2.shape[0] for x2 in x2ds]
    d_ins = [p[0].shape[0] for p in params]
    emb_dims = [p[0].shape[1] for p in params]

    # Lane offsets of each group inside the packed K / N dimensions.
    d_offs = [0]
    for d in d_ins:
        d_offs.append(d_offs[-1] + d)
    e_offs = [0]
    for e in emb_dims:
        e_offs.append(e_offs[-1] + e)
    dp = _round_up(d_offs[-1], _LANE)
    ep = _round_up(e_offs[-1], _LANE)

    tm, rows_padded = _choose_row_tile(max(ns), tm_max)

    # Packed activations: each group occupies its own lane slice of x.
    xp = jnp.zeros((rows_padded, dp), jnp.float32)
    for g in range(G):
        xp = xp.at[:ns[g], d_offs[g]:d_offs[g + 1]].set(x2ds[g])

    # Block-diagonal packed weights, concatenated biases.
    w1p = jnp.zeros((dp, ep), jnp.float32)
    w2p = jnp.zeros((ep, ep), jnp.float32)
    b1p = jnp.zeros((1, ep), jnp.float32)
    b2p = jnp.zeros((1, ep), jnp.float32)
    for g in range(G):
        w1, b1, w2, b2 = (jnp.asarray(a, jnp.float32) for a in params[g])
        w1p = w1p.at[d_offs[g]:d_offs[g + 1], e_offs[g]:e_offs[g + 1]].set(w1)
        w2p = w2p.at[e_offs[g]:e_offs[g + 1], e_offs[g]:e_offs[g + 1]].set(w2)
        b1p = b1p.at[0, e_offs[g]:e_offs[g + 1]].set(b1)
        b2p = b2p.at[0, e_offs[g]:e_offs[g + 1]].set(b2)

    mxu_dtype = jnp.bfloat16 if use_bf16 else jnp.float32
    xp = xp.astype(mxu_dtype)
    w1p = w1p.astype(mxu_dtype)
    w2p = w2p.astype(mxu_dtype)

    grid = (rows_padded // tm,)
    # NOTE: weight/bias blocks are grid-invariant (constant index_map), so the
    # pipeline keeps them resident; at ep=128 their footprint is negligible.
    out = pl.pallas_call(
        _make_embedfc_kernel(approx_gelu),
        out_shape=jax.ShapeDtypeStruct((rows_padded, ep), jnp.float32),
        grid_spec=pl.GridSpec(
            grid=grid,
            in_specs=[
                pl.BlockSpec((tm, dp), lambda i: (i, 0)),   # activations (row-tiled)
                pl.BlockSpec((dp, ep), lambda i: (0, 0)),   # W1 (resident)
                pl.BlockSpec((1, ep), lambda i: (0, 0)),    # b1 (resident)
                pl.BlockSpec((ep, ep), lambda i: (0, 0)),   # W2 (resident)
                pl.BlockSpec((1, ep), lambda i: (0, 0)),    # b2 (resident)
            ],
            out_specs=pl.BlockSpec((tm, ep), lambda i: (i, 0)),
        ),
        compiler_params=pltpu.CompilerParams(
            dimension_semantics=("parallel",)),
    )(xp, w1p, b1p, w2p, b2p)

    return [out[:ns[g], e_offs[g]:e_offs[g + 1]] for g in range(G)]


def reference_embed_fc(x, w1, b1, w2, b2):
    x2d = x.reshape(-1, w1.shape[0])
    h = x2d @ w1 + b1
    g = jax.nn.gelu(h, approximate=False)
    return g @ w2 + b2


# ---------------------------------------------------------------------------
# Kernel 2: DDPM forward noising  x_t = sqrtab[t] * x + sqrtmab[t] * noise
#   Layout: batch is folded into the row axis -> (batch*feat/128, 128) tiles,
#   so every (8,128) vreg is fully populated even at tiny batch sizes.
# ---------------------------------------------------------------------------
def ddpm_noise_kernel(a_ref, b_ref, x_ref, n_ref, o_ref):
    # a_ref/b_ref: (tm, 1) per-row coefficients; x/n/o: (tm, 128) dense tiles.
    o_ref[...] = a_ref[...] * x_ref[...] + b_ref[...] * n_ref[...]


def ddpm_add_noise(x, noise, sqrtab, sqrtmab, ts, *, tm_max=1024):
    batch = x.shape[0]
    flat = x.reshape(batch, -1).astype(jnp.float32)
    nflat = noise.reshape(batch, -1).astype(jnp.float32)
    feat = flat.shape[1]

    # Pad features to a lane multiple and fold batch into the row axis.
    f_p = _round_up(feat, _LANE)
    if f_p != feat:
        flat = jnp.pad(flat, ((0, 0), (0, f_p - feat)))
        nflat = jnp.pad(nflat, ((0, 0), (0, f_p - feat)))
    rows_per_sample = f_p // _LANE
    n_rows = batch * rows_per_sample
    flat = flat.reshape(n_rows, _LANE)
    nflat = nflat.reshape(n_rows, _LANE)

    # Per-row coefficient columns (each sample's scalar repeated over its rows).
    a_rows = jnp.repeat(sqrtab[ts].astype(jnp.float32), rows_per_sample)
    b_rows = jnp.repeat(sqrtmab[ts].astype(jnp.float32), rows_per_sample)

    tm, rows_padded = _choose_row_tile(n_rows, tm_max)
    pad_rows = rows_padded - n_rows
    if pad_rows:
        flat = jnp.pad(flat, ((0, pad_rows), (0, 0)))
        nflat = jnp.pad(nflat, ((0, pad_rows), (0, 0)))
        a_rows = jnp.pad(a_rows, (0, pad_rows))
        b_rows = jnp.pad(b_rows, (0, pad_rows))
    a_rows = a_rows.reshape(rows_padded, 1)
    b_rows = b_rows.reshape(rows_padded, 1)

    grid = (rows_padded // tm,)
    out = pl.pallas_call(
        ddpm_noise_kernel,
        out_shape=jax.ShapeDtypeStruct((rows_padded, _LANE), jnp.float32),
        grid_spec=pl.GridSpec(
            grid=grid,
            in_specs=[
                pl.BlockSpec((tm, 1), lambda i: (i, 0)),
                pl.BlockSpec((tm, 1), lambda i: (i, 0)),
                pl.BlockSpec((tm, _LANE), lambda i: (i, 0)),
                pl.BlockSpec((tm, _LANE), lambda i: (i, 0)),
            ],
            out_specs=pl.BlockSpec((tm, _LANE), lambda i: (i, 0)),
        ),
        compiler_params=pltpu.CompilerParams(
            dimension_semantics=("parallel",)),
    )(a_rows, b_rows, flat, nflat)

    out = out[:n_rows].reshape(batch, f_p)[:, :feat]
    return out.reshape(x.shape).astype(x.dtype)


# ---------------------------------------------------------------------------
if __name__ == "__main__":
    key = jax.random.PRNGKey(0)
    (k_x, k_noise, k_ts, k_mask, k_lab,
     k_tw1, k_tb1, k_tw2, k_tb2,
     k_cw1, k_cb1, k_cw2, k_cb2) = jax.random.split(key, 13)

    # DDPM config (small demo shapes)
    n_T = 400
    betas = (1e-4, 0.02)
    drop_prob = 0.1
    B, C, H, W = 2, 4, 16, 16
    n_classes = 10
    n_feat = 16                     # EmbedFC emb_dim = 2 * n_feat = 32
    emb_dim = 2 * n_feat

    sched = ddpm_schedules(betas[0], betas[1], n_T)

    x = jax.random.normal(k_x, (B, C, H, W), jnp.float32)
    _ts = jax.random.randint(k_ts, (B,), 1, n_T + 1)                 # randint(1, n_T+1)
    noise = jax.random.normal(k_noise, (B, C, H, W), jnp.float32)    # randn_like(x)
    context_mask = jax.random.bernoulli(k_mask, drop_prob, (B,)).astype(jnp.float32)
    digit_labels = jax.random.randint(k_lab, (B,), 0, n_classes)

    # ---- DDPM forward noising (sublane-dense Pallas kernel) ----------------
    x_t = ddpm_add_noise(x, noise, sched["sqrtab"], sched["sqrtmab"], _ts)
    x_t = jax.block_until_ready(x_t)
    x_t_ref = (sched["sqrtab"][_ts][:, None, None, None] * x
               + sched["sqrtmab"][_ts][:, None, None, None] * noise)
    assert x_t.shape == x.shape, x_t.shape
    assert jnp.allclose(x_t, x_t_ref, atol=1e-5, rtol=1e-5), \
        float(jnp.max(jnp.abs(x_t - x_t_ref)))

    # ---- Packed EmbedFC: time-embed + context-embed in ONE lane-dense call -
    def init_embedfc(kw1, kb1, kw2, kb2, d_in, e):
        bound1 = 1.0 / math.sqrt(d_in)
        w1 = jax.random.uniform(kw1, (d_in, e), jnp.float32, -bound1, bound1)
        b1 = jax.random.uniform(kb1, (e,), jnp.float32, -bound1, bound1)
        bound2 = 1.0 / math.sqrt(e)
        w2 = jax.random.uniform(kw2, (e, e), jnp.float32, -bound2, bound2)
        b2 = jax.random.uniform(kb2, (e,), jnp.float32, -bound2, bound2)
        return (w1, b1, w2, b2)

    time_params = init_embedfc(k_tw1, k_tb1, k_tw2, k_tb2, 1, emb_dim)
    ctx_params = init_embedfc(k_cw1, k_cb1, k_cw2, k_cb2, n_classes, emb_dim)

    t_in = (_ts.astype(jnp.float32) / n_T).reshape(B, 1)              # _ts / n_T
    c_onehot = jax.nn.one_hot(digit_labels, n_classes, dtype=jnp.float32)
    c_in = c_onehot * (1.0 - context_mask)[:, None]                   # classifier-free dropout

    t_emb, c_emb = packed_embed_fc([t_in, c_in], [time_params, ctx_params])
    t_emb = jax.block_until_ready(t_emb)
    c_emb = jax.block_until_ready(c_emb)

    t_emb_ref = reference_embed_fc(t_in, *time_params)
    c_emb_ref = reference_embed_fc(c_in, *ctx_params)
    assert t_emb.shape == (B, emb_dim), t_emb.shape
    assert c_emb.shape == (B, emb_dim), c_emb.shape
    assert jnp.allclose(t_emb, t_emb_ref, atol=1e-5, rtol=1e-5), \
        float(jnp.max(jnp.abs(t_emb - t_emb_ref)))
    assert jnp.allclose(c_emb, c_emb_ref, atol=1e-5, rtol=1e-5), \
        float(jnp.max(jnp.abs(c_emb - c_emb_ref)))

    # ---- Optional fast path (bf16 MXU + tanh GELU), loose tolerance --------
    t_fast, c_fast = packed_embed_fc([t_in, c_in], [time_params, ctx_params],
                                     use_bf16=True, approx_gelu=True)
    t_fast = jax.block_until_ready(t_fast)
    c_fast = jax.block_until_ready(c_fast)
    assert jnp.allclose(t_fast, t_emb_ref, atol=1e-1, rtol=1e-1)
    assert jnp.allclose(c_fast, c_emb_ref, atol=1e-1, rtol=1e-1)

    print("KERNEL_OK")
</pallas_src>

<mosaic_0001>
module attributes {stable_mosaic.version = 11 : i64} {
  func.func @ddpm_noise_kernel(%arg0: i32, %arg1: memref<8x1xf32, #tpu.memory_space<vmem>>, %arg2: memref<8x1xf32, #tpu.memory_space<vmem>>, %arg3: memref<8x128xf32, #tpu.memory_space<vmem>>, %arg4: memref<8x128xf32, #tpu.memory_space<vmem>>, %arg5: memref<8x128xf32, #tpu.memory_space<vmem>>) attributes {dimension_semantics = [#tpu.dimension_semantics<parallel>], iteration_bounds = array<i64: 2>, scalar_prefetch = 0 : i64, scratch_operands = 0 : i64, tpu.core_type = #tpu.core_type<tc>, window_params = [{transform_indices = @transform_0, window_bounds = array<i64: 8, 1>}, {transform_indices = @transform_1, window_bounds = array<i64: 8, 1>}, {transform_indices = @transform_2, window_bounds = array<i64: 8, 128>}, {transform_indices = @transform_3, window_bounds = array<i64: 8, 128>}, {transform_indices = @transform_4, window_bounds = array<i64: 8, 128>}]} {
    %c0 = arith.constant 0 : index
    %c0_0 = arith.constant 0 : index
    %0 = vector.load %arg1[%c0, %c0_0] : memref<8x1xf32, #tpu.memory_space<vmem>>, vector<8x1xf32>
    %c0_1 = arith.constant 0 : index
    %c0_2 = arith.constant 0 : index
    %1 = vector.load %arg3[%c0_1, %c0_2] : memref<8x128xf32, #tpu.memory_space<vmem>>, vector<8x128xf32>
    %2 = vector.broadcast %0 : vector<8x1xf32> to vector<8x128xf32>
    %3 = arith.mulf %2, %1 : vector<8x128xf32>
    %c0_3 = arith.constant 0 : index
    %c0_4 = arith.constant 0 : index
    %4 = vector.load %arg2[%c0_3, %c0_4] : memref<8x1xf32, #tpu.memory_space<vmem>>, vector<8x1xf32>
    %c0_5 = arith.constant 0 : index
    %c0_6 = arith.constant 0 : index
    %5 = vector.load %arg4[%c0_5, %c0_6] : memref<8x128xf32, #tpu.memory_space<vmem>>, vector<8x128xf32>
    %6 = vector.broadcast %4 : vector<8x1xf32> to vector<8x128xf32>
    %7 = arith.mulf %6, %5 : vector<8x128xf32>
    %8 = arith.addf %3, %7 : vector<8x128xf32>
    %c0_7 = arith.constant 0 : index
    %c0_8 = arith.constant 0 : index
    %9 = vector.load %arg5[%c0_7, %c0_8] : memref<8x128xf32, #tpu.memory_space<vmem>>, vector<8x128xf32>
    tpu.vector_store %arg5[%c0_7, %c0_8], %8 {strides = array<i32>} : memref<8x128xf32, #tpu.memory_space<vmem>>, vector<8x128xf32>,
    return
  }
  func.func @transform_0(%arg0: i32) -> (i32, i32) {
    %c0_i32 = arith.constant 0 : i32
    %c0_i32_0 = arith.constant 0 : i32
    return %arg0, %c0_i32 : i32, i32
  }
  func.func @transform_1(%arg0: i32) -> (i32, i32) {
    %c0_i32 = arith.constant 0 : i32
    %c0_i32_0 = arith.constant 0 : i32
    return %arg0, %c0_i32 : i32, i32
  }
  func.func @transform_2(%arg0: i32) -> (i32, i32) {
    %c0_i32 = arith.constant 0 : i32
    %c0_i32_0 = arith.constant 0 : i32
    return %arg0, %c0_i32 : i32, i32
  }
  func.func @transform_3(%arg0: i32) -> (i32, i32) {
    %c0_i32 = arith.constant 0 : i32
    %c0_i32_0 = arith.constant 0 : i32
    return %arg0, %c0_i32 : i32, i32
  }
  func.func @transform_4(%arg0: i32) -> (i32, i32) {
    %c0_i32 = arith.constant 0 : i32
    %c0_i32_0 = arith.constant 0 : i32
    return %arg0, %c0_i32 : i32, i32
  }
}

</mosaic_0001>

<llo_original>
// kernel: tpu_custom_call.1
$region0: #{tpu_custom_call.1}
  #allocation0 [shape = 'u32[]', space=smem, size = 0x4, offset = 0x4, fixed_abs, tag = 'smem constant byte address 0x4 - core index']
  #allocation1 [shape = 'u32[72,128]{1,0:T(1,128)}', space=vmem, size = 0x9000, scoped, tag = 'internal scratch']
  %s0 = inlined_call_operand.vmem [shape: f32[16,1], index: 0, kind: input, shape index: {}]
  %s1 = inlined_call_operand.vmem [shape: f32[16,1], index: 1, kind: input, shape index: {}]
  %s2 = inlined_call_operand.vmem [shape: f32[16,128], index: 2, kind: input, shape index: {}]
  %s3 = inlined_call_operand.vmem [shape: f32[16,128], index: 3, kind: input, shape index: {}]
  %s4 = inlined_call_operand.hbm [shape: f32[16,128], index: 4, kind: output, shape index: {}]
  %s5 = sld [smem:[#allocation0]]
  $region49: #{tpu_custom_call.1} parent=0
    _
  %s7 = ssub.s32 1, %s5
  %s8 = scalar_select 0, %s7, %s5
  $region1: #{tpu_custom_call.1} parent=0
    #allocation2 [shape = 'u8[8192]{0}', space=vmem, size = 0x2000, scoped, tag = 'output window, operand 0']
    #allocation3 [shape = 's32[2]{0}', space=sflag, size = 0x8, scoped, tag = 'scoped memory for tpu_custom_call.1']
    %9 = vsyncpa [#allocation3], 0
    %s10 = scalar_lea.sflag [#allocation3], 1
    %11 = vsyncpa %s10, 0
    loop: start=0, step=1, limit=4
    $region2: #{tpu_custom_call.1} parent=1 // loop_pre_header
      _
    $region3: #{tpu_custom_call.1} parent=1 // loop_header
      %s13 = sphi 0, %s17
      %p14 = scmp.ge.s32.totalorder %s13, 4
      %s23 = sphi 0, %s25
      %s26 = sphi 0, %s23
      %s27 = sphi 0, %s26
      %s43 = sphi 0, %s27
      %s49 = sphi 0, %s51
      %s52 = sphi 0, %s49
      %s53 = sphi 0, %s52
      %s69 = sphi 0, %s53
      %s75 = sphi 0, %s77
      %s78 = sphi 0, %s75
      %s79 = sphi 0, %s78
      %s95 = sphi 0, %s79
      %s101 = sphi 0, %s103
      %s104 = sphi 0, %s101
      %s105 = sphi 0, %s104
      %s121 = sphi 0, %s105
      %s127 = sphi 0, %s129
      %s130 = sphi 0, %s127
      %s131 = sphi 0, %s130
      %s147 = sphi 0, %s131
    $region4: #{tpu_custom_call.1} parent=1 // loop_header_branch
      %16 = sbr.rel (%p14) target = $region8
    $region5: #{tpu_custom_call.1} parent=1 // loop_body
      %s18 = ssub.s32 %s13, 1
      %s19 = ssub.s32 %s13, 2
      %s20 = sadd.s32 %s13, 1
      %s21 = ssub.s32 %s13, %s20
      %p22 = scmp.eq.s32.totalorder %s21, 0
      %s24 = sadd.s32 %s23, 1
      %s25 = scalar_select %p22, %s23, %s24
      %p28 = pneg %p22
      %p29 = scmp.eq.s32.totalorder %s13, 1
      %p30 = por %p28, %p29
      %p31 = scmp.ne.s32.totalorder %s23, %s26
      %p32 = scmp.eq.s32.totalorder %s13, 0
      %p33 = por %p31, %p32
      %p34 = scmp.ne.s32.totalorder %s23, %s26
      %p35 = scmp.eq.s32.totalorder %s18, 1
      %p36 = por %p34, %p35
      %p37 = scmp.ne.s32.totalorder %s26, %s27
      %p38 = scmp.eq.s32.totalorder %s18, 0
      %p39 = por %p37, %p38
      %p40 = scmp.ne.s32.totalorder %s26, %s27
      %p41 = scmp.eq.s32.totalorder %s19, 1
      %p42 = por %p40, %p41
      %p44 = scmp.ne.s32.totalorder %s27, %s43
      %p45 = scmp.eq.s32.totalorder %s19, 0
      %p46 = por %p44, %p45
      %s47 = ssub.s32 %s13, %s20
      %p48 = scmp.eq.s32.totalorder %s47, 0
      %s50 = sadd.s32 %s49, 1
      %s51 = scalar_select %p48, %s49, %s50
      %p54 = pneg %p48
      %p55 = scmp.eq.s32.totalorder %s13, 1
      %p56 = por %p54, %p55
      %p57 = scmp.ne.s32.totalorder %s49, %s52
      %p58 = scmp.eq.s32.totalorder %s13, 0
      %p59 = por %p57, %p58
      %p60 = scmp.ne.s32.totalorder %s49, %s52
      %p61 = scmp.eq.s32.totalorder %s18, 1
      %p62 = por %p60, %p61
      %p63 = scmp.ne.s32.totalorder %s52, %s53
      %p64 = scmp.eq.s32.totalorder %s18, 0
      %p65 = por %p63, %p64
      %p66 = scmp.ne.s32.totalorder %s52, %s53
      %p67 = scmp.eq.s32.totalorder %s19, 1
      %p68 = por %p66, %p67
      %p70 = scmp.ne.s32.totalorder %s53, %s69
      %p71 = scmp.eq.s32.totalorder %s19, 0
      %p72 = por %p70, %p71
      %s73 = ssub.s32 %s13, %s20
      %p74 = scmp.eq.s32.totalorder %s73, 0
      %s76 = sadd.s32 %s75, 1
      %s77 = scalar_select %p74, %s75, %s76
      %p80 = pneg %p74
      %p81 = scmp.eq.s32.totalorder %s13, 1
      %p82 = por %p80, %p81
      %p83 = scmp.ne.s32.totalorder %s75, %s78
      %p84 = scmp.eq.s32.totalorder %s13, 0
      %p85 = por %p83, %p84
      %p86 = scmp.ne.s32.totalorder %s75, %s78
      %p87 = scmp.eq.s32.totalorder %s18, 1
      %p88 = por %p86, %p87
      %p89 = scmp.ne.s32.totalorder %s78, %s79
      %p90 = scmp.eq.s32.totalorder %s18, 0
      %p91 = por %p89, %p90
      %p92 = scmp.ne.s32.totalorder %s78, %s79
      %p93 = scmp.eq.s32.totalorder %s19, 1
      %p94 = por %p92, %p93
      %p96 = scmp.ne.s32.totalorder %s79, %s95
      %p97 = scmp.eq.s32.totalorder %s19, 0
      %p98 = por %p96, %p97
      %s99 = ssub.s32 %s13, %s20
      %p100 = scmp.eq.s32.totalorder %s99, 0
      %s102 = sadd.s32 %s101, 1
      %s103 = scalar_select %p100, %s101, %s102
      %p106 = pneg %p100
      %p107 = scmp.eq.s32.totalorder %s13, 1
      %p108 = por %p106, %p107
      %p109 = scmp.ne.s32.totalorder %s101, %s104
      %p110 = scmp.eq.s32.totalorder %s13, 0
      %p111 = por %p109, %p110
      %p112 = scmp.ne.s32.totalorder %s101, %s104
      %p113 = scmp.eq.s32.totalorder %s18, 1
      %p114 = por %p112, %p113
      %p115 = scmp.ne.s32.totalorder %s104, %s105
      %p116 = scmp.eq.s32.totalorder %s18, 0
      %p117 = por %p115, %p116
      %p118 = scmp.ne.s32.totalorder %s104, %s105
      %p119 = scmp.eq.s32.totalorder %s19, 1
      %p120 = por %p118, %p119
      %p122 = scmp.ne.s32.totalorder %s105, %s121
      %p123 = scmp.eq.s32.totalorder %s19, 0
      %p124 = por %p122, %p123
      %s125 = ssub.s32 %s13, %s20
      %p126 = scmp.eq.s32.totalorder %s125, 0
      %s128 = sadd.s32 %s127, 1
      %s129 = scalar_select %p126, %s127, %s128
      %p132 = pneg %p126
      %p133 = scmp.eq.s32.totalorder %s13, 1
      %p134 = por %p132, %p133
      %p135 = scmp.ne.s32.totalorder %s127, %s130
      %p136 = scmp.eq.s32.totalorder %s13, 0
      %p137 = por %p135, %p136
      %p138 = scmp.ne.s32.totalorder %s127, %s130
      %p139 = scmp.eq.s32.totalorder %s18, 1
      %p140 = por %p138, %p139
      %p141 = scmp.ne.s32.totalorder %s130, %s131
      %p142 = scmp.eq.s32.totalorder %s18, 0
      %p143 = por %p141, %p142
      %p144 = scmp.ne.s32.totalorder %s130, %s131
      %p145 = scmp.eq.s32.totalorder %s19, 1
      %p146 = por %p144, %p145
      %p148 = scmp.ne.s32.totalorder %s131, %s147
      %p149 = scmp.eq.s32.totalorder %s19, 0
      %p150 = por %p148, %p149
      %p151 = scmp.le.s32.totalorder 1, %s13
      %p152 = scmp.lt.s32.totalorder %s13, 3
      %p153 = pnand %p151, %p152
      %p154 = pneg %p153
      // Predicated region
      $region9: #{tpu_custom_call.1} parent=5 // pred_check
        _
      $region10: #{tpu_custom_call.1} parent=5 // pred_check_branch
        %156 = sbr.rel (%p153) target = $region12
      $region11: #{tpu_custom_call.1} parent=5 // pred_region
        %s157 = ssub.s32 %s13, 1
      $region12: #{tpu_custom_call.1} parent=5 // pred_fallthru
        _
      %p158 = scmp.lt.s32.totalorder %s13, 2
      // Predicated region
      $region13: #{tpu_custom_call.1} parent=5 // pred_check
        %p159 = pneg %p158
      $region14: #{tpu_custom_call.1} parent=5 // pred_check_branch
        %161 = sbr.rel (%p159) target = $region16
      $region15: #{tpu_custom_call.1} parent=5 // pred_region
        // Predicated region
        $region17: #{tpu_custom_call.1} parent=15 // pred_check
          %p162 = pneg %p33
        $region18: #{tpu_custom_call.1} parent=15 // pred_check_branch
          %164 = sbr.rel (%p162) target = $region20
        $region19: #{tpu_custom_call.1} parent=15 // pred_region
          %p165 = scmp.lt.s32.totalorder %s13, 1
          %s166 = scalar_select %p165, %s13, 1
          %s167 = smul.addr %s166, 8
          %s168 = scalar_lea.vmem %s0, %s167
        $region20: #{tpu_custom_call.1} parent=15 // pred_fallthru
          _
        // Predicated region
        $region21: #{tpu_custom_call.1} parent=15 // pred_check
          %p169 = pneg %p59
        $region22: #{tpu_custom_call.1} parent=15 // pred_check_branch
          %171 = sbr.rel (%p169) target = $region24
        $region23: #{tpu_custom_call.1} parent=15 // pred_region
          %p172 = scmp.lt.s32.totalorder %s13, 1
          %s173 = scalar_select %p172, %s13, 1
          %s174 = smul.addr %s173, 8
          %s175 = scalar_lea.vmem %s1, %s174
        $region24: #{tpu_custom_call.1} parent=15 // pred_fallthru
          _
        // Predicated region
        $region25: #{tpu_custom_call.1} parent=15 // pred_check
          %p176 = pneg %p85
        $region26: #{tpu_custom_call.1} parent=15 // pred_check_branch
          %178 = sbr.rel (%p176) target = $region28
        $region27: #{tpu_custom_call.1} parent=15 // pred_region
          %p179 = scmp.lt.s32.totalorder %s13, 1
          %s180 = scalar_select %p179, %s13, 1
          %s181 = smul.addr %s180, 8
          %s182 = scalar_lea.vmem %s2, %s181
        $region28: #{tpu_custom_call.1} parent=15 // pred_fallthru
          _
        // Predicated region
        $region29: #{tpu_custom_call.1} parent=15 // pred_check
          %p183 = pneg %p111
        $region30: #{tpu_custom_call.1} parent=15 // pred_check_branch
          %185 = sbr.rel (%p183) target = $region32
        $region31: #{tpu_custom_call.1} parent=15 // pred_region
          %p186 = scmp.lt.s32.totalorder %s13, 1
          %s187 = scalar_select %p186, %s13, 1
          %s188 = smul.addr %s187, 8
          %s189 = scalar_lea.vmem %s3, %s188
        $region32: #{tpu_custom_call.1} parent=15 // pred_fallthru
          _
      $region16: #{tpu_custom_call.1} parent=5 // pred_fallthru
        _
      %p190 = scmp.le.s32.totalorder 1, %s13
      %p191 = scmp.lt.s32.totalorder %s13, 3
      %p192 = pnand %p190, %p191
      %p193 = pneg %p192
      // Predicated region
      $region33: #{tpu_custom_call.1} parent=5 // pred_check
        _
      $region34: #{tpu_custom_call.1} parent=5 // pred_check_branch
        %195 = sbr.rel (%p192) target = $region36
      $region35: #{tpu_custom_call.1} parent=5 // pred_region
        %s196 = ssub.s32 %s13, 1
        %p197 = scmp.lt.s32.totalorder %s18, 1
        %s198 = scalar_select %p197, %s18, 1
        %s199 = smul.addr %s198, 8
        %s200 = scalar_lea.vmem %s0, %s199
        %p201 = pneg %p39
        %p202 = pneg %p36
        %p203 = scmp.lt.s32.totalorder %s18, 1
        %s204 = scalar_select %p203, %s18, 1
        %s205 = smul.addr %s204, 8
        %s206 = scalar_lea.vmem %s1, %s205
        %p207 = pneg %p65
        %p208 = pneg %p62
        %p209 = scmp.lt.s32.totalorder %s18, 1
        %s210 = scalar_select %p209, %s18, 1
        %s211 = smul.addr %s210, 8
        %s212 = scalar_lea.vmem %s2, %s211
        %p213 = pneg %p91
        %p214 = pneg %p88
        %p215 = scmp.lt.s32.totalorder %s18, 1
        %s216 = scalar_select %p215, %s18, 1
        %s217 = smul.addr %s216, 8
        %s218 = scalar_lea.vmem %s3, %s217
        %p219 = pneg %p117
        %p220 = pneg %p114
        %p221 = pneg %p143
        %p222 = pneg %p140
        %s223 = sand.u32 %s130, 1
        %s224 = scalar_lea.sflag [#allocation3], %s223
        %s225 = sand.u32 %s130, 1
        %s226 = smul.addr %s225, 8
        %s227 = scalar_lea.vmem [#allocation2], %s226
        %p228 = scmp.lt.s32.totalorder %s18, 1
        %s229 = scalar_select %p228, %s18, 1
        %s230 = smul.addr %s229, 8
        %s231 = scalar_lea.vmem %s0, %s230
        %p232 = scmp.lt.s32.totalorder %s18, 1
        %s233 = scalar_select %p232, %s18, 1
        %s234 = smul.addr %s233, 8
        %s235 = scalar_lea.vmem %s1, %s234
        %p236 = scmp.lt.s32.totalorder %s18, 1
        %s237 = scalar_select %p236, %s18, 1
        %s238 = smul.addr %s237, 8
        %s239 = scalar_lea.vmem %s2, %s238
        %p240 = scmp.lt.s32.totalorder %s18, 1
        %s241 = scalar_select %p240, %s18, 1
        %s242 = smul.addr %s241, 8
        %s243 = scalar_lea.vmem %s3, %s242
        %v244 = vld [vmem:[%s231] sm:$0xff]
        %v245 = vld [vmem:[%s239] sm:$0xff]
        %247 = vset.pattern.permute.xlu0 0
        %248 = vperm.xlu0 %247, %v244
        %v249 = vpop.permute.xlu0 %248
        %v251 = vmul.f32 %v249, %v245
        %v252 = vld [vmem:[%s235] sm:$0xff]
        %v253 = vld [vmem:[%s243] sm:$0xff]
        %255 = vset.pattern.permute.xlu0 0
        %256 = vperm.xlu0 %255, %v252
        %v257 = vpop.permute.xlu0 %256
        %v259 = vmul.f32 %v257, %v253
        %v260 = vadd.f32 %v251, %v259
        %261 = vst [vmem:[%s227] sm:$0xff] %v260
        %s262 = sand.u32 %s130, 1
        %s263 = scalar_lea.sflag [#allocation3], %s262
        %s264 = sand.u32 %s130, 1
        %s265 = smul.addr %s264, 8
        %s266 = scalar_lea.vmem [#allocation2], %s265
        // Predicated region
        $region37: #{tpu_custom_call.1} parent=35 // pred_check
          %p267 = pneg %p140
        $region38: #{tpu_custom_call.1} parent=35 // pred_check_branch
          %269 = sbr.rel (%p267) target = $region40
        $region39: #{tpu_custom_call.1} parent=35 // pred_region
          %271 = vsyncadd %s263, 0
          %s272 = smul.addr %s18, 8
          %s273 = scalar_lea.hbm %s4, %s272
          %s275 = sshll.u32 %s266, 4
          %s276 = int_to_ptr.vmem [resolvable:$true] %s275
          %s277 = sshll.u32 %s273, 4
          %s278 = int_to_ptr.hbm [resolvable:$true] %s277
          %280 = dma.vmem_to_hbm [thread:$0]  %s276, 128, %s278, %s263
        $region40: #{tpu_custom_call.1} parent=35 // pred_fallthru
          _
      $region36: #{tpu_custom_call.1} parent=5 // pred_fallthru
        _
      %p281 = scmp.le.s32.totalorder 2, %s13
      // Predicated region
      $region41: #{tpu_custom_call.1} parent=5 // pred_check
        %p282 = pneg %p281
      $region42: #{tpu_custom_call.1} parent=5 // pred_check_branch
        %284 = sbr.rel (%p282) target = $region44
      $region43: #{tpu_custom_call.1} parent=5 // pred_region
        %s285 = ssub.s32 %s13, 2
        // Predicated region
        $region45: #{tpu_custom_call.1} parent=43 // pred_check
          %p286 = pneg %p146
        $region46: #{tpu_custom_call.1} parent=43 // pred_check_branch
          %288 = sbr.rel (%p286) target = $region48
        $region47: #{tpu_custom_call.1} parent=43 // pred_region
          %s289 = sand.u32 %s131, 1
          %s290 = scalar_lea.sflag [#allocation3], %s289
          %s291 = sand.u32 %s131, 1
          %s292 = smul.addr %s291, 8
          %s293 = scalar_lea.vmem [#allocation2], %s292
          %295 = dma.done %s290, 128
        $region48: #{tpu_custom_call.1} parent=43 // pred_fallthru
          _
      $region44: #{tpu_custom_call.1} parent=5 // pred_fallthru
        _
    $region6: #{tpu_custom_call.1} parent=1 // loop_footer
      %s17 = sadd.s32 1, %s13
    $region7: #{tpu_custom_call.1} parent=1 // loop_footer_branch
      %12 = sbr.rel target = $region3
    $region8: #{tpu_custom_call.1} parent=1 // loop_exit
      _
    %296 = vsyncpa [#allocation3], 1
    %s297 = scalar_lea.sflag [#allocation3], 1
    %298 = vsyncpa %s297, 1

</llo_original>
